<compile_context>
chip_gen: v5e
topology: v5e:2x2
jax: 0.10.0
libtpu: 0.0.40
codegen_flags: <defaults>
</compile_context>

<pallas_src>
import math

import jax
import jax.numpy as jnp
import numpy as np
from jax.experimental import pallas as pl
from jax.experimental.pallas import tpu as pltpu

# ---------------- configuration (small shapes consistent with the module) -----
B = 2            # batch
N = 8            # sample_num
DIM = 3          # grasp dim (fc_p input dim)
C_LOCAL = 32     # local feature dim  (local_dim)
C_GLOBAL = 32    # global feature dim (global_dim)
T_DIM = 16       # time embedding dim
HIDDEN = 32      # hidden_size
N_BLOCKS = 5     # n_blocks
OUT_DIM = 1      # out_dim
OUT_PAD = 128    # lane-dense padded output width
PLANE_RES = 16   # feature-plane resolution
PADDING = 0.1
C_DIM = C_LOCAL + C_GLOBAL + T_DIM          # conditioning dim fed to fc_c
D_AUG = DIM + C_DIM + 1                     # [grasp | feature | 1]


# ---------------- fused decoder MLP as a single Pallas TPU kernel -------------
def decoder_kernel(x_ref, wcond_ref, wblk_ref, bblk_ref, wo_ref, out_ref):
    # x:      (TM, D_AUG)           bf16   [grasp | feature | 1]
    # wcond:  (D_AUG, NB*H)         bf16   col-block 0 = fc_p + fc_c[0] (+ biases),
    #                                      col-block i = fc_c[i] (+ bias), i >= 1
    # wblk:   (NB, 2, H, H)         bf16   [:,0] = fc_0 weight, [:,1] = fc_1 weight
    # bblk:   (NB, 2, H)            f32    fc_0 / fc_1 biases
    # wo:     (H, OUT_PAD)          bf16   fc_out weight zero-padded to 128 lanes
    x = x_ref[...]
    # one fused MXU pass for fc_p(grasp) and ALL n_blocks fc_c(feature)
    cond = jnp.dot(x, wcond_ref[...], preferred_element_type=jnp.float32)
    b_all = bblk_ref[...]                       # hoisted once (tiny)

    net = cond[:, 0:HIDDEN]                     # = fc_p(grasp) + fc_c[0](feature)
    for i in range(N_BLOCKS):                   # static unroll (n_blocks is small)
        if i > 0:
            net = net + cond[:, i * HIDDEN:(i + 1) * HIDDEN]
        # ResnetBlockFC: x + fc_1(relu(fc_0(relu(x))))   (size_in == size_out)
        h = jnp.dot(jnp.maximum(net, 0.0).astype(jnp.bfloat16), wblk_ref[i, 0],
                    preferred_element_type=jnp.float32) + b_all[i, 0:1, :]
        dx = jnp.dot(jnp.maximum(h, 0.0).astype(jnp.bfloat16), wblk_ref[i, 1],
                     preferred_element_type=jnp.float32) + b_all[i, 1:2, :]
        net = net + dx
    # fc_out (bias added in the wrapper); 128-lane output -> unmasked vector stores
    out_ref[...] = jnp.dot(jnp.maximum(net, 0.0).astype(jnp.bfloat16), wo_ref[...],
                           preferred_element_type=jnp.float32)


def decoder_pallas(x_aug, w_cond, w_blk, b_blk, wo_pad):
    M = x_aug.shape[0]
    # Single grid step for small M; 256-row tiles (MXU-friendly) if M grows.
    tm = M if M <= 512 else 256
    tm = max(8, ((tm + 7) // 8) * 8)
    m_pad = ((M + tm - 1) // tm) * tm
    if m_pad != M:
        x_aug = jnp.pad(x_aug, ((0, m_pad - M), (0, 0)))

    out = pl.pallas_call(
        decoder_kernel,
        out_shape=jax.ShapeDtypeStruct((m_pad, OUT_PAD), jnp.float32),
        grid=(m_pad // tm,),
        in_specs=[
            pl.BlockSpec((tm, D_AUG), lambda i: (i, 0)),                        # activations
            pl.BlockSpec((D_AUG, N_BLOCKS * HIDDEN), lambda i: (0, 0)),         # fused cond W
            pl.BlockSpec((N_BLOCKS, 2, HIDDEN, HIDDEN), lambda i: (0, 0, 0, 0)),# block weights
            pl.BlockSpec((N_BLOCKS, 2, HIDDEN), lambda i: (0, 0, 0)),           # block biases
            pl.BlockSpec((HIDDEN, OUT_PAD), lambda i: (0, 0)),                  # fc_out (padded)
        ],
        out_specs=pl.BlockSpec((tm, OUT_PAD), lambda i: (i, 0)),
        compiler_params=pltpu.CompilerParams(dimension_semantics=("parallel",)),
    )(x_aug, w_cond, w_blk, b_blk, wo_pad)
    return out[:M, :OUT_DIM]


def pack_decoder_params(params):
    """Pack the module's Linear weights into the fused layout used by the kernel."""
    nb_h = N_BLOCKS * HIDDEN
    w_cond = jnp.zeros((D_AUG, nb_h), jnp.float32)
    w_cond = w_cond.at[:DIM, 0:HIDDEN].set(params['wp'])            # fc_p -> col-block 0
    for i in range(N_BLOCKS):
        w_cond = w_cond.at[DIM:DIM + C_DIM, i * HIDDEN:(i + 1) * HIDDEN].set(
            params['wc'][i])                                        # fc_c[i] -> col-block i
        bias = params['bc'][i, 0]
        if i == 0:
            bias = bias + params['bp'][0]
        w_cond = w_cond.at[D_AUG - 1, i * HIDDEN:(i + 1) * HIDDEN].set(bias)  # ones-column row
    w_blk = jnp.stack([params['w0'], params['w1']], axis=1)         # (NB, 2, H, H)
    b_blk = jnp.stack([params['b0'][:, 0, :], params['b1'][:, 0, :]], axis=1)  # (NB, 2, H)
    wo_pad = jnp.zeros((HIDDEN, OUT_PAD), jnp.float32).at[:, :OUT_DIM].set(params['wo'])
    return (w_cond.astype(jnp.bfloat16), w_blk.astype(jnp.bfloat16),
            b_blk.astype(jnp.float32), wo_pad.astype(jnp.bfloat16))


def decoder_pallas_path(grasp_flat, feat_flat, params):
    M = grasp_flat.shape[0]
    ones = jnp.ones((M, 1), jnp.float32)
    x_aug = jnp.concatenate([grasp_flat, feat_flat, ones], axis=-1).astype(jnp.bfloat16)
    w_cond, w_blk, b_blk, wo_pad = pack_decoder_params(params)
    out = decoder_pallas(x_aug, w_cond, w_blk, b_blk, wo_pad)
    return out + params['bo']           # fc_out bias added outside the kernel


def decoder_reference_bf16(grasp_flat, feat_flat, params):
    """Plain-JAX reference using the kernel's exact bf16/f32 precision plan."""
    M = grasp_flat.shape[0]
    ones = jnp.ones((M, 1), jnp.float32)
    x_aug = jnp.concatenate([grasp_flat, feat_flat, ones], axis=-1).astype(jnp.bfloat16)
    w_cond, w_blk, b_blk, wo_pad = pack_decoder_params(params)
    cond = jnp.dot(x_aug, w_cond, preferred_element_type=jnp.float32)
    net = cond[:, 0:HIDDEN]
    for i in range(N_BLOCKS):
        if i > 0:
            net = net + cond[:, i * HIDDEN:(i + 1) * HIDDEN]
        h = jnp.dot(jnp.maximum(net, 0.0).astype(jnp.bfloat16), w_blk[i, 0],
                    preferred_element_type=jnp.float32) + b_blk[i, 0:1, :]
        dx = jnp.dot(jnp.maximum(h, 0.0).astype(jnp.bfloat16), w_blk[i, 1],
                     preferred_element_type=jnp.float32) + b_blk[i, 1:2, :]
        net = net + dx
    out = jnp.dot(jnp.maximum(net, 0.0).astype(jnp.bfloat16), wo_pad,
                  preferred_element_type=jnp.float32)
    return out[:, :OUT_DIM] + params['bo']


def decoder_reference_f32(grasp_flat, feat_flat, params):
    """Full-f32, module-faithful math (fc_p; per-block fc_c + ResnetBlockFC; fc_out)."""
    net = grasp_flat @ params['wp'] + params['bp']
    for i in range(N_BLOCKS):
        net = net + feat_flat @ params['wc'][i] + params['bc'][i]
        h = jnp.maximum(net, 0.0) @ params['w0'][i] + params['b0'][i]
        dx = jnp.maximum(h, 0.0) @ params['w1'][i] + params['b1'][i]
        net = net + dx
    return jnp.maximum(net, 0.0) @ params['wo'] + params['bo']


# ---------------- feature samplers / time embedding (plain JAX glue) ----------
def normalize_coordinate(p, padding=0.1, plane='xz'):
    if plane == 'xz':
        xy = jnp.stack([p[..., 0], p[..., 2]], axis=-1)
    elif plane == 'xy':
        xy = jnp.stack([p[..., 0], p[..., 1]], axis=-1)
    else:  # 'yz'
        xy = jnp.stack([p[..., 1], p[..., 2]], axis=-1)
    xy_new = xy / (1.0 + padding + 10e-6) + 0.5
    return jnp.clip(xy_new, 0.0, 1.0 - 10e-6)


def grid_sample_bilinear(feat, uv):
    """Bilinear grid-sample, align_corners=True, border padding (ConvONet style).
    feat: (B, C, H, W); uv: (B, N, 2) in [-1, 1]. Returns (B, C, N)."""
    _, _, H, W = feat.shape
    x = (uv[..., 0] + 1.0) * 0.5 * (W - 1)
    y = (uv[..., 1] + 1.0) * 0.5 * (H - 1)
    x0f = jnp.floor(x)
    y0f = jnp.floor(y)
    wx1 = x - x0f
    wy1 = y - y0f
    wx0 = 1.0 - wx1
    wy0 = 1.0 - wy1
    x0 = jnp.clip(x0f, 0, W - 1).astype(jnp.int32)
    x1 = jnp.clip(x0f + 1, 0, W - 1).astype(jnp.int32)
    y0 = jnp.clip(y0f, 0, H - 1).astype(jnp.int32)
    y1 = jnp.clip(y0f + 1, 0, H - 1).astype(jnp.int32)

    def gather(yy, xx):
        # TODO(synk): data-dependent gather -> plain JAX (no clean TPU-Pallas fit).
        return jax.vmap(lambda f, yi, xi: f[:, yi, xi])(feat, yy, xx)  # (B, C, N)

    v00 = gather(y0, x0)
    v01 = gather(y0, x1)
    v10 = gather(y1, x0)
    v11 = gather(y1, x1)
    w00 = (wy0 * wx0)[:, None, :]
    w01 = (wy0 * wx1)[:, None, :]
    w10 = (wy1 * wx0)[:, None, :]
    w11 = (wy1 * wx1)[:, None, :]
    return v00 * w00 + v01 * w01 + v10 * w10 + v11 * w11


def local_feature_sampler(p, c):
    """ConvONet-style feature_sampler(p, c): bilinear sample each plane and sum."""
    acc = 0.0
    for plane in ('xz', 'xy', 'yz'):
        uv = normalize_coordinate(p, PADDING, plane)
        vgrid = 2.0 * uv - 1.0
        acc = acc + grid_sample_bilinear(c[plane], vgrid)
    return jnp.transpose(acc, (0, 2, 1))        # (B, N, C_LOCAL)


def global_feature_sampler(c, sample_num):
    # TODO(synk): original global_feat_sampler module is not in the spec; substitute
    # broadcasting a per-batch global latent code to every sample.
    g = c['global']                              # (B, C_GLOBAL)
    return jnp.broadcast_to(g[:, None, :], (g.shape[0], sample_num, g.shape[1]))


def sinusoidal_pos_emb(x, dim):
    half = dim // 2
    scale = math.log(10000.0) / (half - 1)
    freqs = jnp.exp(jnp.arange(half, dtype=jnp.float32) * -scale)
    e = x[:, None] * freqs[None, :]
    return jnp.concatenate([jnp.sin(e), jnp.cos(e)], axis=-1)


def mish(x):
    return x * jnp.tanh(jax.nn.softplus(x))


# ---------------- full forward (mirrors TimeGlobalDecoder.forward) ------------
def time_global_decoder_forward(grasp, c, time, params, decoder=None):
    decoder = decoder_pallas_path if decoder is None else decoder
    batch_size, sample_num = grasp.shape[0], grasp.shape[1]
    p = grasp[..., :3]

    local_feats = local_feature_sampler(p, c)                    # (B, N, C_LOCAL)
    global_feats = global_feature_sampler(c, sample_num)         # (B, N, C_GLOBAL)
    feature = jnp.concatenate([local_feats, global_feats], axis=-1)

    # time_mlp: SinusoidalPosEmb -> Linear -> Mish -> Linear, repeated over samples
    te = sinusoidal_pos_emb(time.reshape(-1).astype(jnp.float32), T_DIM)
    te = mish(te @ params['wt1'] + params['bt1'])
    te = te @ params['wt2'] + params['bt2']
    te = jnp.broadcast_to(te[:, None, :], (batch_size, sample_num, T_DIM))
    feature = jnp.concatenate([feature, te], axis=-1)            # (B, N, C_DIM)

    grasp_flat = grasp.reshape(-1, DIM).astype(jnp.float32)
    feat_flat = feature.reshape(-1, C_DIM).astype(jnp.float32)
    out = decoder(grasp_flat, feat_flat, params)                 # (B*N, OUT_DIM)
    return out.reshape(batch_size, sample_num)                   # squeeze(-1)


# ---------------- deterministic parameter init ---------------------------------
def init_params(key):
    keys = jax.random.split(key, 5)

    def lin(k, fan_in, fan_out):
        kw, kb = jax.random.split(k)
        w = jax.random.normal(kw, (fan_in, fan_out), jnp.float32) / math.sqrt(fan_in)
        b = jax.random.normal(kb, (1, fan_out), jnp.float32) * 0.01
        return w, b

    wp, bp = lin(keys[0], DIM, HIDDEN)
    wc_l, bc_l, w0_l, b0_l, w1_l, b1_l = [], [], [], [], [], []
    bkeys = jax.random.split(keys[1], N_BLOCKS * 3)
    for i in range(N_BLOCKS):
        w, b = lin(bkeys[3 * i + 0], C_DIM, HIDDEN); wc_l.append(w); bc_l.append(b)
        w, b = lin(bkeys[3 * i + 1], HIDDEN, HIDDEN); w0_l.append(w); b0_l.append(b)
        w, b = lin(bkeys[3 * i + 2], HIDDEN, HIDDEN); w1_l.append(w); b1_l.append(b)
    wo, bo = lin(keys[2], HIDDEN, OUT_DIM)
    wt1, bt1 = lin(keys[3], T_DIM, 2 * T_DIM)
    wt2, bt2 = lin(keys[4], 2 * T_DIM, T_DIM)

    return dict(
        wp=wp, bp=bp,
        wc=jnp.stack(wc_l), bc=jnp.stack(bc_l),
        w0=jnp.stack(w0_l), b0=jnp.stack(b0_l),
        w1=jnp.stack(w1_l), b1=jnp.stack(b1_l),
        wo=wo, bo=bo,
        wt1=wt1, bt1=bt1, wt2=wt2, bt2=bt2,
    )


if __name__ == "__main__":
    key = jax.random.PRNGKey(0)
    kp, kg, kt, kxz, kxy, kyz, kgl = jax.random.split(key, 7)

    params = init_params(kp)

    grasp = jax.random.uniform(kg, (B, N, DIM), jnp.float32, -0.4, 0.4)
    c = {
        'xz': jax.random.normal(kxz, (B, C_LOCAL, PLANE_RES, PLANE_RES), jnp.float32),
        'xy': jax.random.normal(kxy, (B, C_LOCAL, PLANE_RES, PLANE_RES), jnp.float32),
        'yz': jax.random.normal(kyz, (B, C_LOCAL, PLANE_RES, PLANE_RES), jnp.float32),
        'global': jax.random.normal(kgl, (B, C_GLOBAL), jnp.float32),
    }
    time = jax.random.uniform(kt, (B,), jnp.float32, 0.0, 1.0)

    out = time_global_decoder_forward(grasp, c, time, params,
                                      decoder=decoder_pallas_path)
    out = jax.block_until_ready(out)
    assert out.shape == (B, N), out.shape

    # tight check: Pallas kernel vs plain-JAX reference with the identical bf16 plan
    out_bf16 = jax.block_until_ready(
        time_global_decoder_forward(grasp, c, time, params,
                                    decoder=decoder_reference_bf16))
    np.testing.assert_allclose(np.asarray(out), np.asarray(out_bf16),
                               rtol=2e-3, atol=2e-3)

    # loose check: vs the full-f32 module-faithful reference (bf16 MXU operand error)
    out_f32 = jax.block_until_ready(
        time_global_decoder_forward(grasp, c, time, params,
                                    decoder=decoder_reference_f32))
    np.testing.assert_allclose(np.asarray(out), np.asarray(out_f32),
                               rtol=5e-2, atol=5e-2)

    print("KERNEL_OK")
</pallas_src>

<mosaic_0001>
module attributes {stable_mosaic.version = 11 : i64} {
  func.func @decoder_kernel(%arg0: i32, %arg1: memref<16x84xbf16, #tpu.memory_space<vmem>>, %arg2: memref<84x160xbf16, #tpu.memory_space<vmem>>, %arg3: memref<5x2x32x32xbf16, #tpu.memory_space<vmem>>, %arg4: memref<5x2x32xf32, #tpu.memory_space<vmem>>, %arg5: memref<32x128xbf16, #tpu.memory_space<vmem>>, %arg6: memref<16x128xf32, #tpu.memory_space<vmem>>) attributes {dimension_semantics = [#tpu.dimension_semantics<parallel>], iteration_bounds = array<i64: 1>, scalar_prefetch = 0 : i64, scratch_operands = 0 : i64, tpu.core_type = #tpu.core_type<tc>, window_params = [{transform_indices = @transform_0, window_bounds = array<i64: 16, 84>}, {pipeline_mode = #tpu.pipeline_mode<synchronous>, transform_indices = @transform_1, window_bounds = array<i64: 84, 160>}, {pipeline_mode = #tpu.pipeline_mode<synchronous>, transform_indices = @transform_2, window_bounds = array<i64: 5, 2, 32, 32>}, {pipeline_mode = #tpu.pipeline_mode<synchronous>, transform_indices = @transform_3, window_bounds = array<i64: 5, 2, 32>}, {pipeline_mode = #tpu.pipeline_mode<synchronous>, transform_indices = @transform_4, window_bounds = array<i64: 32, 128>}, {transform_indices = @transform_5, window_bounds = array<i64: 16, 128>}]} {
    %c0 = arith.constant 0 : index
    %c0_0 = arith.constant 0 : index
    %0 = vector.load %arg1[%c0, %c0_0] : memref<16x84xbf16, #tpu.memory_space<vmem>>, vector<16x84xbf16>
    %c0_1 = arith.constant 0 : index
    %c0_2 = arith.constant 0 : index
    %1 = vector.load %arg2[%c0_1, %c0_2] : memref<84x160xbf16, #tpu.memory_space<vmem>>, vector<84x160xbf16>
    %cst = arith.constant dense<0.000000e+00> : vector<16x160xf32>
    %2 = tpu.matmul %0, %1, %cst {dimension_numbers = #tpu.dot_dimension_numbers<[1], [0], [0], [1], [0, 0, 1, 1], [], []>} : vector<16x84xbf16>, vector<84x160xbf16>, vector<16x160xf32> -> vector<16x160xf32>
    %c0_3 = arith.constant 0 : index
    %c0_4 = arith.constant 0 : index
    %c0_5 = arith.constant 0 : index
    %3 = vector.load %arg4[%c0_3, %c0_4, %c0_5] : memref<5x2x32xf32, #tpu.memory_space<vmem>>, vector<5x2x32xf32>
    %4 = vector.extract_strided_slice %2 {offsets = [0, 0], sizes = [16, 32], strides = [1, 1]} : vector<16x160xf32> to vector<16x32xf32>
    %cst_6 = arith.constant 0.000000e+00 : f32
    %5 = vector.broadcast %cst_6 : f32 to vector<16x32xf32>
    %6 = arith.maximumf %4, %5 : vector<16x32xf32>
    %7 = arith.truncf %6 : vector<16x32xf32> to vector<16x32xbf16>
    %c0_7 = arith.constant 0 : index
    %c0_8 = arith.constant 0 : index
    %c0_9 = arith.constant 0 : index
    %c0_10 = arith.constant 0 : index
    %8 = vector.load %arg3[%c0_7, %c0_8, %c0_9, %c0_10] : memref<5x2x32x32xbf16, #tpu.memory_space<vmem>>, vector<1x1x32x32xbf16>
    %9 = vector.shape_cast %8 : vector<1x1x32x32xbf16> to vector<32x32xbf16>
    %cst_11 = arith.constant dense<0.000000e+00> : vector<16x32xf32>
    %10 = tpu.matmul %7, %9, %cst_11 {dimension_numbers = #tpu.dot_dimension_numbers<[1], [0], [0], [1], [0, 0, 1, 1], [], []>} : vector<16x32xbf16>, vector<32x32xbf16>, vector<16x32xf32> -> vector<16x32xf32>
    %11 = vector.extract_strided_slice %3 {offsets = [0, 0, 0], sizes = [1, 1, 32], strides = [1, 1, 1]} : vector<5x2x32xf32> to vector<1x1x32xf32>
    %12 = vector.shape_cast %11 : vector<1x1x32xf32> to vector<1x32xf32>
    %13 = vector.broadcast %12 : vector<1x32xf32> to vector<16x32xf32>
    %14 = arith.addf %10, %13 : vector<16x32xf32>
    %cst_12 = arith.constant 0.000000e+00 : f32
    %15 = vector.broadcast %cst_12 : f32 to vector<16x32xf32>
    %16 = arith.maximumf %14, %15 : vector<16x32xf32>
    %17 = arith.truncf %16 : vector<16x32xf32> to vector<16x32xbf16>
    %c0_13 = arith.constant 0 : index
    %c1 = arith.constant 1 : index
    %c0_14 = arith.constant 0 : index
    %c0_15 = arith.constant 0 : index
    %18 = vector.load %arg3[%c0_13, %c1, %c0_14, %c0_15] : memref<5x2x32x32xbf16, #tpu.memory_space<vmem>>, vector<1x1x32x32xbf16>
    %19 = vector.shape_cast %18 : vector<1x1x32x32xbf16> to vector<32x32xbf16>
    %cst_16 = arith.constant dense<0.000000e+00> : vector<16x32xf32>
    %20 = tpu.matmul %17, %19, %cst_16 {dimension_numbers = #tpu.dot_dimension_numbers<[1], [0], [0], [1], [0, 0, 1, 1], [], []>} : vector<16x32xbf16>, vector<32x32xbf16>, vector<16x32xf32> -> vector<16x32xf32>
    %21 = vector.extract_strided_slice %3 {offsets = [0, 1, 0], sizes = [1, 1, 32], strides = [1, 1, 1]} : vector<5x2x32xf32> to vector<1x1x32xf32>
    %22 = vector.shape_cast %21 : vector<1x1x32xf32> to vector<1x32xf32>
    %23 = vector.broadcast %22 : vector<1x32xf32> to vector<16x32xf32>
    %24 = arith.addf %20, %23 : vector<16x32xf32>
    %25 = arith.addf %4, %24 : vector<16x32xf32>
    %26 = vector.extract_strided_slice %2 {offsets = [0, 32], sizes = [16, 32], strides = [1, 1]} : vector<16x160xf32> to vector<16x32xf32>
    %27 = arith.addf %25, %26 : vector<16x32xf32>
    %cst_17 = arith.constant 0.000000e+00 : f32
    %28 = vector.broadcast %cst_17 : f32 to vector<16x32xf32>
    %29 = arith.maximumf %27, %28 : vector<16x32xf32>
    %30 = arith.truncf %29 : vector<16x32xf32> to vector<16x32xbf16>
    %c1_18 = arith.constant 1 : index
    %c0_19 = arith.constant 0 : index
    %c0_20 = arith.constant 0 : index
    %c0_21 = arith.constant 0 : index
    %31 = vector.load %arg3[%c1_18, %c0_19, %c0_20, %c0_21] : memref<5x2x32x32xbf16, #tpu.memory_space<vmem>>, vector<1x1x32x32xbf16>
    %32 = vector.shape_cast %31 : vector<1x1x32x32xbf16> to vector<32x32xbf16>
    %cst_22 = arith.constant dense<0.000000e+00> : vector<16x32xf32>
    %33 = tpu.matmul %30, %32, %cst_22 {dimension_numbers = #tpu.dot_dimension_numbers<[1], [0], [0], [1], [0, 0, 1, 1], [], []>} : vector<16x32xbf16>, vector<32x32xbf16>, vector<16x32xf32> -> vector<16x32xf32>
    %34 = vector.extract_strided_slice %3 {offsets = [1, 0, 0], sizes = [1, 1, 32], strides = [1, 1, 1]} : vector<5x2x32xf32> to vector<1x1x32xf32>
    %35 = vector.shape_cast %34 : vector<1x1x32xf32> to vector<1x32xf32>
    %36 = vector.broadcast %35 : vector<1x32xf32> to vector<16x32xf32>
    %37 = arith.addf %33, %36 : vector<16x32xf32>
    %cst_23 = arith.constant 0.000000e+00 : f32
    %38 = vector.broadcast %cst_23 : f32 to vector<16x32xf32>
    %39 = arith.maximumf %37, %38 : vector<16x32xf32>
    %40 = arith.truncf %39 : vector<16x32xf32> to vector<16x32xbf16>
    %c1_24 = arith.constant 1 : index
    %c1_25 = arith.constant 1 : index
    %c0_26 = arith.constant 0 : index
    %c0_27 = arith.constant 0 : index
    %41 = vector.load %arg3[%c1_24, %c1_25, %c0_26, %c0_27] : memref<5x2x32x32xbf16, #tpu.memory_space<vmem>>, vector<1x1x32x32xbf16>
    %42 = vector.shape_cast %41 : vector<1x1x32x32xbf16> to vector<32x32xbf16>
    %cst_28 = arith.constant dense<0.000000e+00> : vector<16x32xf32>
    %43 = tpu.matmul %40, %42, %cst_28 {dimension_numbers = #tpu.dot_dimension_numbers<[1], [0], [0], [1], [0, 0, 1, 1], [], []>} : vector<16x32xbf16>, vector<32x32xbf16>, vector<16x32xf32> -> vector<16x32xf32>
    %44 = vector.extract_strided_slice %3 {offsets = [1, 1, 0], sizes = [1, 1, 32], strides = [1, 1, 1]} : vector<5x2x32xf32> to vector<1x1x32xf32>
    %45 = vector.shape_cast %44 : vector<1x1x32xf32> to vector<1x32xf32>
    %46 = vector.broadcast %45 : vector<1x32xf32> to vector<16x32xf32>
    %47 = arith.addf %43, %46 : vector<16x32xf32>
    %48 = arith.addf %27, %47 : vector<16x32xf32>
    %49 = vector.extract_strided_slice %2 {offsets = [0, 64], sizes = [16, 32], strides = [1, 1]} : vector<16x160xf32> to vector<16x32xf32>
    %50 = arith.addf %48, %49 : vector<16x32xf32>
    %cst_29 = arith.constant 0.000000e+00 : f32
    %51 = vector.broadcast %cst_29 : f32 to vector<16x32xf32>
    %52 = arith.maximumf %50, %51 : vector<16x32xf32>
    %53 = arith.truncf %52 : vector<16x32xf32> to vector<16x32xbf16>
    %c2 = arith.constant 2 : index
    %c0_30 = arith.constant 0 : index
    %c0_31 = arith.constant 0 : index
    %c0_32 = arith.constant 0 : index
    %54 = vector.load %arg3[%c2, %c0_30, %c0_31, %c0_32] : memref<5x2x32x32xbf16, #tpu.memory_space<vmem>>, vector<1x1x32x32xbf16>
    %55 = vector.shape_cast %54 : vector<1x1x32x32xbf16> to vector<32x32xbf16>
    %cst_33 = arith.constant dense<0.000000e+00> : vector<16x32xf32>
    %56 = tpu.matmul %53, %55, %cst_33 {dimension_numbers = #tpu.dot_dimension_numbers<[1], [0], [0], [1], [0, 0, 1, 1], [], []>} : vector<16x32xbf16>, vector<32x32xbf16>, vector<16x32xf32> -> vector<16x32xf32>
    %57 = vector.extract_strided_slice %3 {offsets = [2, 0, 0], sizes = [1, 1, 32], strides = [1, 1, 1]} : vector<5x2x32xf32> to vector<1x1x32xf32>
    %58 = vector.shape_cast %57 : vector<1x1x32xf32> to vector<1x32xf32>
    %59 = vector.broadcast %58 : vector<1x32xf32> to vector<16x32xf32>
    %60 = arith.addf %56, %59 : vector<16x32xf32>
    %cst_34 = arith.constant 0.000000e+00 : f32
    %61 = vector.broadcast %cst_34 : f32 to vector<16x32xf32>
    %62 = arith.maximumf %60, %61 : vector<16x32xf32>
    %63 = arith.truncf %62 : vector<16x32xf32> to vector<16x32xbf16>
    %c2_35 = arith.constant 2 : index
    %c1_36 = arith.constant 1 : index
    %c0_37 = arith.constant 0 : index
    %c0_38 = arith.constant 0 : index
    %64 = vector.load %arg3[%c2_35, %c1_36, %c0_37, %c0_38] : memref<5x2x32x32xbf16, #tpu.memory_space<vmem>>, vector<1x1x32x32xbf16>
    %65 = vector.shape_cast %64 : vector<1x1x32x32xbf16> to vector<32x32xbf16>
    %cst_39 = arith.constant dense<0.000000e+00> : vector<16x32xf32>
    %66 = tpu.matmul %63, %65, %cst_39 {dimension_numbers = #tpu.dot_dimension_numbers<[1], [0], [0], [1], [0, 0, 1, 1], [], []>} : vector<16x32xbf16>, vector<32x32xbf16>, vector<16x32xf32> -> vector<16x32xf32>
    %67 = vector.extract_strided_slice %3 {offsets = [2, 1, 0], sizes = [1, 1, 32], strides = [1, 1, 1]} : vector<5x2x32xf32> to vector<1x1x32xf32>
    %68 = vector.shape_cast %67 : vector<1x1x32xf32> to vector<1x32xf32>
    %69 = vector.broadcast %68 : vector<1x32xf32> to vector<16x32xf32>
    %70 = arith.addf %66, %69 : vector<16x32xf32>
    %71 = arith.addf %50, %70 : vector<16x32xf32>
    %72 = vector.extract_strided_slice %2 {offsets = [0, 96], sizes = [16, 32], strides = [1, 1]} : vector<16x160xf32> to vector<16x32xf32>
    %73 = arith.addf %71, %72 : vector<16x32xf32>
    %cst_40 = arith.constant 0.000000e+00 : f32
    %74 = vector.broadcast %cst_40 : f32 to vector<16x32xf32>
    %75 = arith.maximumf %73, %74 : vector<16x32xf32>
    %76 = arith.truncf %75 : vector<16x32xf32> to vector<16x32xbf16>
    %c3 = arith.constant 3 : index
    %c0_41 = arith.constant 0 : index
    %c0_42 = arith.constant 0 : index
    %c0_43 = arith.constant 0 : index
    %77 = vector.load %arg3[%c3, %c0_41, %c0_42, %c0_43] : memref<5x2x32x32xbf16, #tpu.memory_space<vmem>>, vector<1x1x32x32xbf16>
    %78 = vector.shape_cast %77 : vector<1x1x32x32xbf16> to vector<32x32xbf16>
    %cst_44 = arith.constant dense<0.000000e+00> : vector<16x32xf32>
    %79 = tpu.matmul %76, %78, %cst_44 {dimension_numbers = #tpu.dot_dimension_numbers<[1], [0], [0], [1], [0, 0, 1, 1], [], []>} : vector<16x32xbf16>, vector<32x32xbf16>, vector<16x32xf32> -> vector<16x32xf32>
    %80 = vector.extract_strided_slice %3 {offsets = [3, 0, 0], sizes = [1, 1, 32], strides = [1, 1, 1]} : vector<5x2x32xf32> to vector<1x1x32xf32>
    %81 = vector.shape_cast %80 : vector<1x1x32xf32> to vector<1x32xf32>
    %82 = vector.broadcast %81 : vector<1x32xf32> to vector<16x32xf32>
    %83 = arith.addf %79, %82 : vector<16x32xf32>
    %cst_45 = arith.constant 0.000000e+00 : f32
    %84 = vector.broadcast %cst_45 : f32 to vector<16x32xf32>
    %85 = arith.maximumf %83, %84 : vector<16x32xf32>
    %86 = arith.truncf %85 : vector<16x32xf32> to vector<16x32xbf16>
    %c3_46 = arith.constant 3 : index
    %c1_47 = arith.constant 1 : index
    %c0_48 = arith.constant 0 : index
    %c0_49 = arith.constant 0 : index
    %87 = vector.load %arg3[%c3_46, %c1_47, %c0_48, %c0_49] : memref<5x2x32x32xbf16, #tpu.memory_space<vmem>>, vector<1x1x32x32xbf16>
    %88 = vector.shape_cast %87 : vector<1x1x32x32xbf16> to vector<32x32xbf16>
    %cst_50 = arith.constant dense<0.000000e+00> : vector<16x32xf32>
    %89 = tpu.matmul %86, %88, %cst_50 {dimension_numbers = #tpu.dot_dimension_numbers<[1], [0], [0], [1], [0, 0, 1, 1], [], []>} : vector<16x32xbf16>, vector<32x32xbf16>, vector<16x32xf32> -> vector<16x32xf32>
    %90 = vector.extract_strided_slice %3 {offsets = [3, 1, 0], sizes = [1, 1, 32], strides = [1, 1, 1]} : vector<5x2x32xf32> to vector<1x1x32xf32>
    %91 = vector.shape_cast %90 : vector<1x1x32xf32> to vector<1x32xf32>
    %92 = vector.broadcast %91 : vector<1x32xf32> to vector<16x32xf32>
    %93 = arith.addf %89, %92 : vector<16x32xf32>
    %94 = arith.addf %73, %93 : vector<16x32xf32>
    %95 = vector.extract_strided_slice %2 {offsets = [0, 128], sizes = [16, 32], strides = [1, 1]} : vector<16x160xf32> to vector<16x32xf32>
    %96 = arith.addf %94, %95 : vector<16x32xf32>
    %cst_51 = arith.constant 0.000000e+00 : f32
    %97 = vector.broadcast %cst_51 : f32 to vector<16x32xf32>
    %98 = arith.maximumf %96, %97 : vector<16x32xf32>
    %99 = arith.truncf %98 : vector<16x32xf32> to vector<16x32xbf16>
    %c4 = arith.constant 4 : index
    %c0_52 = arith.constant 0 : index
    %c0_53 = arith.constant 0 : index
    %c0_54 = arith.constant 0 : index
    %100 = vector.load %arg3[%c4, %c0_52, %c0_53, %c0_54] : memref<5x2x32x32xbf16, #tpu.memory_space<vmem>>, vector<1x1x32x32xbf16>
    %101 = vector.shape_cast %100 : vector<1x1x32x32xbf16> to vector<32x32xbf16>
    %cst_55 = arith.constant dense<0.000000e+00> : vector<16x32xf32>
    %102 = tpu.matmul %99, %101, %cst_55 {dimension_numbers = #tpu.dot_dimension_numbers<[1], [0], [0], [1], [0, 0, 1, 1], [], []>} : vector<16x32xbf16>, vector<32x32xbf16>, vector<16x32xf32> -> vector<16x32xf32>
    %103 = vector.extract_strided_slice %3 {offsets = [4, 0, 0], sizes = [1, 1, 32], strides = [1, 1, 1]} : vector<5x2x32xf32> to vector<1x1x32xf32>
    %104 = vector.shape_cast %103 : vector<1x1x32xf32> to vector<1x32xf32>
    %105 = vector.broadcast %104 : vector<1x32xf32> to vector<16x32xf32>
    %106 = arith.addf %102, %105 : vector<16x32xf32>
    %cst_56 = arith.constant 0.000000e+00 : f32
    %107 = vector.broadcast %cst_56 : f32 to vector<16x32xf32>
    %108 = arith.maximumf %106, %107 : vector<16x32xf32>
    %109 = arith.truncf %108 : vector<16x32xf32> to vector<16x32xbf16>
    %c4_57 = arith.constant 4 : index
    %c1_58 = arith.constant 1 : index
    %c0_59 = arith.constant 0 : index
    %c0_60 = arith.constant 0 : index
    %110 = vector.load %arg3[%c4_57, %c1_58, %c0_59, %c0_60] : memref<5x2x32x32xbf16, #tpu.memory_space<vmem>>, vector<1x1x32x32xbf16>
    %111 = vector.shape_cast %110 : vector<1x1x32x32xbf16> to vector<32x32xbf16>
    %cst_61 = arith.constant dense<0.000000e+00> : vector<16x32xf32>
    %112 = tpu.matmul %109, %111, %cst_61 {dimension_numbers = #tpu.dot_dimension_numbers<[1], [0], [0], [1], [0, 0, 1, 1], [], []>} : vector<16x32xbf16>, vector<32x32xbf16>, vector<16x32xf32> -> vector<16x32xf32>
    %113 = vector.extract_strided_slice %3 {offsets = [4, 1, 0], sizes = [1, 1, 32], strides = [1, 1, 1]} : vector<5x2x32xf32> to vector<1x1x32xf32>
    %114 = vector.shape_cast %113 : vector<1x1x32xf32> to vector<1x32xf32>
    %115 = vector.broadcast %114 : vector<1x32xf32> to vector<16x32xf32>
    %116 = arith.addf %112, %115 : vector<16x32xf32>
    %117 = arith.addf %96, %116 : vector<16x32xf32>
    %cst_62 = arith.constant 0.000000e+00 : f32
    %118 = vector.broadcast %cst_62 : f32 to vector<16x32xf32>
    %119 = arith.maximumf %117, %118 : vector<16x32xf32>
    %120 = arith.truncf %119 : vector<16x32xf32> to vector<16x32xbf16>
    %c0_63 = arith.constant 0 : index
    %c0_64 = arith.constant 0 : index
    %121 = vector.load %arg5[%c0_63, %c0_64] : memref<32x128xbf16, #tpu.memory_space<vmem>>, vector<32x128xbf16>
    %cst_65 = arith.constant dense<0.000000e+00> : vector<16x128xf32>
    %122 = tpu.matmul %120, %121, %cst_65 {dimension_numbers = #tpu.dot_dimension_numbers<[1], [0], [0], [1], [0, 0, 1, 1], [], []>} : vector<16x32xbf16>, vector<32x128xbf16>, vector<16x128xf32> -> vector<16x128xf32>
    %c0_66 = arith.constant 0 : index
    %c0_67 = arith.constant 0 : index
    %123 = vector.load %arg6[%c0_66, %c0_67] : memref<16x128xf32, #tpu.memory_space<vmem>>, vector<16x128xf32>
    tpu.vector_store %arg6[%c0_66, %c0_67], %122 {strides = array<i32>} : memref<16x128xf32, #tpu.memory_space<vmem>>, vector<16x128xf32>,
    return
  }
  func.func @transform_0(%arg0: i32) -> (i32, i32) {
    %c0_i32 = arith.constant 0 : i32
    %c0_i32_0 = arith.constant 0 : i32
    return %arg0, %c0_i32 : i32, i32
  }
  func.func @transform_1(%arg0: i32) -> (i32, i32) {
    %c0_i32 = arith.constant 0 : i32
    %c0_i32_0 = arith.constant 0 : i32
    %c0_i32_1 = arith.constant 0 : i32
    return %c0_i32, %c0_i32_0 : i32, i32
  }
  func.func @transform_2(%arg0: i32) -> (i32, i32, i32, i32) {
    %c0_i32 = arith.constant 0 : i32
    %c0_i32_0 = arith.constant 0 : i32
    %c0_i32_1 = arith.constant 0 : i32
    %c0_i32_2 = arith.constant 0 : i32
    %c0_i32_3 = arith.constant 0 : i32
    return %c0_i32, %c0_i32_0, %c0_i32_1, %c0_i32_2 : i32, i32, i32, i32
  }
  func.func @transform_3(%arg0: i32) -> (i32, i32, i32) {
    %c0_i32 = arith.constant 0 : i32
    %c0_i32_0 = arith.constant 0 : i32
    %c0_i32_1 = arith.constant 0 : i32
    %c0_i32_2 = arith.constant 0 : i32
    return %c0_i32, %c0_i32_0, %c0_i32_1 : i32, i32, i32
  }
  func.func @transform_4(%arg0: i32) -> (i32, i32) {
    %c0_i32 = arith.constant 0 : i32
    %c0_i32_0 = arith.constant 0 : i32
    %c0_i32_1 = arith.constant 0 : i32
    return %c0_i32, %c0_i32_0 : i32, i32
  }
  func.func @transform_5(%arg0: i32) -> (i32, i32) {
    %c0_i32 = arith.constant 0 : i32
    %c0_i32_0 = arith.constant 0 : i32
    return %arg0, %c0_i32 : i32, i32
  }
}

</mosaic_0001>

<llo_original>
// kernel: tpu_custom_call.1
$region0: #{tpu_custom_call.1}
  #allocation0 [shape = 'u32[]', space=smem, size = 0x4, offset = 0x4, fixed_abs, tag = 'smem constant byte address 0x4 - core index']
  #allocation1 [shape = 'u32[72,128]{1,0:T(1,128)}', space=vmem, size = 0x9000, scoped, tag = 'internal scratch']
  %s0 = inlined_call_operand.vmem [shape: bf16[16,84], index: 0, kind: input, shape index: {}]
  %s1 = inlined_call_operand.vmem [shape: bf16[84,160], index: 1, kind: input, shape index: {}]
  %s2 = inlined_call_operand.vmem [shape: bf16[5,2,32,32], index: 2, kind: input, shape index: {}]
  %s3 = inlined_call_operand.hbm [shape: f32[5,2,32], index: 3, kind: input, shape index: {}]
  %s4 = inlined_call_operand.hbm [shape: bf16[32,128], index: 4, kind: input, shape index: {}]
  %s5 = inlined_call_operand.hbm [shape: f32[16,128], index: 5, kind: output, shape index: {}]
  %s6 = sld [smem:[#allocation0]]
  $region38: #{tpu_custom_call.1} parent=0
    _
  %s8 = ssub.s32 1, %s6
  %s9 = scalar_select 0, %s8, %s6
  $region1: #{tpu_custom_call.1} parent=0
    #allocation2 [shape = 'u8[5120]{0}', space=vmem, size = 0x1400, scoped, tag = 'input window, operand 3, single buffered']
    #allocation3 [shape = 's32[1]{0}', space=sflag, size = 0x4, scoped, tag = 'scoped memory for tpu_custom_call.1']
    #allocation4 [shape = 's32[1]{0}', space=sflag, size = 0x4, scoped, tag = 'scoped memory for tpu_custom_call.1']
    #allocation5 [shape = 'u8[8192]{0}', space=vmem, size = 0x2000, scoped, tag = 'input window, operand 4, single buffered']
    #allocation6 [shape = 's32[1]{0}', space=sflag, size = 0x4, scoped, tag = 'scoped memory for tpu_custom_call.1']
    #allocation7 [shape = 'u8[8192]{0}', space=vmem, size = 0x2000, scoped, tag = 'output window, operand 0, single buffered']
    %10 = vsyncpa [#allocation3], 0
    %11 = vsyncpa [#allocation6], 0
    %12 = vsyncpa [#allocation4], 0
    // Predicated region
    $region2: #{tpu_custom_call.1} parent=1 // pred_check
      _
    $region3: #{tpu_custom_call.1} parent=1 // pred_check_branch
      %14 = sbr.rel (0) target = $region5
    $region4: #{tpu_custom_call.1} parent=1 // pred_region
      _
    $region5: #{tpu_custom_call.1} parent=1 // pred_fallthru
      _
    // Predicated region
    $region6: #{tpu_custom_call.1} parent=1 // pred_check
      _
    $region7: #{tpu_custom_call.1} parent=1 // pred_check_branch
      %16 = sbr.rel (0) target = $region9
    $region8: #{tpu_custom_call.1} parent=1 // pred_region
      _
    $region9: #{tpu_custom_call.1} parent=1 // pred_fallthru
      _
    // Predicated region
    $region10: #{tpu_custom_call.1} parent=1 // pred_check
      _
    $region11: #{tpu_custom_call.1} parent=1 // pred_check_branch
      %18 = sbr.rel (0) target = $region13
    $region12: #{tpu_custom_call.1} parent=1 // pred_region
      _
    $region13: #{tpu_custom_call.1} parent=1 // pred_fallthru
      _
    // Predicated region
    $region14: #{tpu_custom_call.1} parent=1 // pred_check
      _
    $region15: #{tpu_custom_call.1} parent=1 // pred_check_branch
      %20 = sbr.rel (0) target = $region17
    $region16: #{tpu_custom_call.1} parent=1 // pred_region
      %22 = vsyncadd [#allocation3], 0
      %s23 = sshll.u32 %s3, 4
      %s24 = int_to_ptr.hbm [resolvable:$true] %s23
      %s25 = sshll.u32 [#allocation2], 4
      %s26 = int_to_ptr.vmem [resolvable:$true] %s25
      %31 = dma.hbm_to_vmem [thread:$0]  %s24, 160, %s26, [#allocation3], 32, 32, 2
    $region17: #{tpu_custom_call.1} parent=1 // pred_fallthru
      _
    // Predicated region
    $region18: #{tpu_custom_call.1} parent=1 // pred_check
      _
    $region19: #{tpu_custom_call.1} parent=1 // pred_check_branch
      %33 = sbr.rel (0) target = $region21
    $region20: #{tpu_custom_call.1} parent=1 // pred_region
      %35 = vsyncadd [#allocation6], 0
      %s36 = sshll.u32 %s4, 4
      %s37 = int_to_ptr.hbm [resolvable:$true] %s36
      %s38 = sshll.u32 [#allocation5], 4
      %s39 = int_to_ptr.vmem [resolvable:$true] %s38
      %44 = dma.hbm_to_vmem [thread:$0]  %s37, 256, %s39, [#allocation6], 64, 64, 4
    $region21: #{tpu_custom_call.1} parent=1 // pred_fallthru
      _
    // Predicated region
    $region22: #{tpu_custom_call.1} parent=1 // pred_check
      _
    $region23: #{tpu_custom_call.1} parent=1 // pred_check_branch
      %46 = sbr.rel (0) target = $region25
    $region24: #{tpu_custom_call.1} parent=1 // pred_region
      %48 = dma.done [#allocation3], 160
    $region25: #{tpu_custom_call.1} parent=1 // pred_fallthru
      _
    // Predicated region
    $region26: #{tpu_custom_call.1} parent=1 // pred_check
      _
    $region27: #{tpu_custom_call.1} parent=1 // pred_check_branch
      %50 = sbr.rel (0) target = $region29
    $region28: #{tpu_custom_call.1} parent=1 // pred_region
      %52 = dma.done [#allocation6], 256
    $region29: #{tpu_custom_call.1} parent=1 // pred_fallthru
      _
    %v54 = vld [vmem:[%s0] sm:$0xf]
    %v55 = vld [vmem:[%s0 + $0x4] sm:$0xf]
    %v56 = vld [vmem:[%s1] sm:$0xff]
    %v57 = vld [vmem:[%s1 + $0x8] sm:$0xff]
    %v58 = vld [vmem:[%s1 + $0x10] sm:$0xff]
    %v59 = vld [vmem:[%s1 + $0x18] sm:$0xff]
    %v60 = vld [vmem:[%s1 + $0x20] sm:$0xff]
    %v61 = vld [vmem:[%s1 + $0x28] sm:$0xff]
    %v62 = vld [vmem:[%s1 + $0x30] sm:$0xff]
    %v63 = vld [vmem:[%s1 + $0x38] sm:$0xff]
    %v64 = vld [vmem:[%s1 + $0x40] sm:$0xff]
    %v65 = vld [vmem:[%s1 + $0x48] sm:$0xff]
    %v66 = vld [vmem:[%s1 + $0x50] sm:$0x33]
    %v69 = vunpack.c.l.b16 %v54
    %v70 = vunpack.c.l.b16 %v55
    %v71 = vpack.c.b16 %v70, %v69
    %v83 = vunpack.c.l.b16 %v56
    %v84 = vunpack.c.h.b16 %v56
    %v85 = vunpack.c.l.b16 %v57
    %v86 = vunpack.c.h.b16 %v57
    %v87 = vunpack.c.l.b16 %v58
    %v88 = vunpack.c.h.b16 %v58
    %v89 = vunpack.c.l.b16 %v59
    %v90 = vunpack.c.h.b16 %v59
    %v91 = vunpack.c.l.b16 %v60
    %v92 = vunpack.c.h.b16 %v60
    %v93 = vunpack.c.l.b16 %v61
    %v94 = vunpack.c.h.b16 %v61
    %v95 = vunpack.c.l.b16 %v62
    %v96 = vunpack.c.h.b16 %v62
    %v97 = vunpack.c.l.b16 %v63
    %v98 = vunpack.c.h.b16 %v63
    %v99 = vunpack.c.l.b16 %v64
    %v100 = vunpack.c.h.b16 %v64
    %v101 = vunpack.c.l.b16 %v65
    %v102 = vunpack.c.h.b16 %v65
    %v103 = vunpack.c.l.b16 %v66
    %v104 = vunpack.c.h.b16 %v66
    %v105 = vpack.c.b16 %v85, %v83
    %v106 = vpack.c.b16 %v86, %v84
    %v107 = vpack.c.b16 %v89, %v87
    %v108 = vpack.c.b16 %v90, %v88
    %v109 = vpack.c.b16 %v93, %v91
    %v110 = vpack.c.b16 %v94, %v92
    %v111 = vpack.c.b16 %v97, %v95
    %v112 = vpack.c.b16 %v98, %v96
    %v113 = vpack.c.b16 %v101, %v99
    %v114 = vpack.c.b16 %v102, %v100
    %v115 = vpack.c.b16 %v103, %v103
    %v116 = vpack.c.b16 %v104, %v104
    %vm127 = vcmask 687104
    %v129 = vsel %vm127, %v71, 0
    %vm131 = vcmask 1041408
    %v133 = vsel %vm131, %v115, 0
    %v136 = vsel %vm131, %v116, 0
    %138 = vmatpush.bf16.msra.mxu0 0
    %139 = vmatpush.bf16.msra.mxu0 0
    %140 = vmatpush.bf16.msra.mxu0 %v133
    %141 = vmatpush.bf16.msra.mxu0 %v113
    %142 = vmatpush.bf16.msra.mxu0 %v111
    %143 = vmatpush.bf16.msra.mxu0 %v109
    %144 = vmatpush.bf16.msra.mxu0 %v107
    %145 = vmatpush.bf16.msra.mxu0 %v105
    %146 = vmatmul.bf16.gmra.mxu0 %v129
    %v147 = vpop.f32.mrf.mxu0
    %v148 = vadd.f32 0.0, %v147
    %v149 = vpop.f32.mrf.mxu0
    %v150 = vadd.f32 0.0, %v149
    %151 = vdwg.mxu0
    %152 = vmatpush.bf16.msra.mxu0 0
    %153 = vmatpush.bf16.msra.mxu0 0
    %154 = vmatpush.bf16.msra.mxu0 %v136
    %155 = vmatpush.bf16.msra.mxu0 %v114
    %156 = vmatpush.bf16.msra.mxu0 %v112
    %157 = vmatpush.bf16.msra.mxu0 %v110
    %158 = vmatpush.bf16.msra.mxu0 %v108
    %159 = vmatpush.bf16.msra.mxu0 %v106
    %160 = vmatmul.bf16.gmra.mxu0 %v129
    %v161 = vpop.f32.mrf.mxu0
    %v162 = vadd.f32 0.0, %v161
    %v163 = vpop.f32.mrf.mxu0
    %v164 = vadd.f32 0.0, %v163
    %165 = vdwg.mxu0
    %v166 = vld [vmem:[#allocation2] sm:$0x3]
    %v167 = vld [vmem:[#allocation2 + $0x2] sm:$0x3]
    %v168 = vld [vmem:[#allocation2 + $0x4] sm:$0x3]
    %v169 = vld [vmem:[#allocation2 + $0x6] sm:$0x3]
    %v170 = vld [vmem:[#allocation2 + $0x8] sm:$0x3]
    %v171 = vmax.f32 %v148, 0.0
    %v172 = vmax.f32 %v150, 0.0
    %v173 = vpack.c.bf16 %v172, %v171
    %v174 = vld [vmem:[%s2] sm:$0xf]
    %v175 = vld [vmem:[%s2 + $0x4] sm:$0xf]
    %v176 = vld [vmem:[%s2 + $0x8] sm:$0xf]
    %v177 = vld [vmem:[%s2 + $0xc] sm:$0xf]
    %v178 = vperm.slane %v166, 0
    %v183 = vunpack.c.l.b16 %v174
    %v184 = vunpack.c.l.b16 %v175
    %v185 = vunpack.c.l.b16 %v176
    %v186 = vunpack.c.l.b16 %v177
    %v187 = vpack.c.b16 %v184, %v183
    %v188 = vpack.c.b16 %v186, %v185
    %vm191 = vcmask 261120
    %v193 = vsel %vm191, %v173, 0
    %195 = vmatpush.bf16.msra.mxu0 0
    %196 = vmatpush.bf16.msra.mxu0 0
    %197 = vmatpush.bf16.msra.mxu0 0
    %198 = vmatpush.bf16.msra.mxu0 0
    %199 = vmatpush.bf16.msra.mxu0 0
    %200 = vmatpush.bf16.msra.mxu0 0
    %201 = vmatpush.bf16.msra.mxu0 %v188
    %202 = vmatpush.bf16.msra.mxu0 %v187
    %203 = vmatmul.bf16.gmra.mxu0 %v193
    %v204 = vpop.f32.mrf.mxu0
    %v205 = vadd.f32 %v178, %v204
    %v206 = vpop.f32.mrf.mxu0
    %v207 = vadd.f32 %v178, %v206
    %208 = vdwg.mxu0
    %v209 = vmax.f32 %v205, 0.0
    %v210 = vmax.f32 %v207, 0.0
    %v211 = vpack.c.bf16 %v210, %v209
    %s212 = scalar_lea.vmem %s2, 16
    %v213 = vld [vmem:[%s212] sm:$0xf]
    %v214 = vld [vmem:[%s212 + $0x4] sm:$0xf]
    %v215 = vld [vmem:[%s212 + $0x8] sm:$0xf]
    %v216 = vld [vmem:[%s212 + $0xc] sm:$0xf]
    %v217 = vperm.slane %v166, 1
    %v222 = vunpack.c.l.b16 %v213
    %v223 = vunpack.c.l.b16 %v214
    %v224 = vunpack.c.l.b16 %v215
    %v225 = vunpack.c.l.b16 %v216
    %v226 = vpack.c.b16 %v223, %v222
    %v227 = vpack.c.b16 %v225, %v224
    %v231 = vsel %vm191, %v211, 0
    %233 = vmatpush.bf16.msra.mxu0 0
    %234 = vmatpush.bf16.msra.mxu0 0
    %235 = vmatpush.bf16.msra.mxu0 0
    %236 = vmatpush.bf16.msra.mxu0 0
    %237 = vmatpush.bf16.msra.mxu0 0
    %238 = vmatpush.bf16.msra.mxu0 0
    %239 = vmatpush.bf16.msra.mxu0 %v227
    %240 = vmatpush.bf16.msra.mxu0 %v226
    %241 = vmatmul.bf16.gmra.mxu0 %v231
    %v242 = vpop.f32.mrf.mxu0
    %v243 = vadd.f32 %v217, %v242
    %v244 = vpop.f32.mrf.mxu0
    %v245 = vadd.f32 %v217, %v244
    %246 = vdwg.mxu0
    %v247 = vadd.f32 %v148, %v243
    %v248 = vadd.f32 %v150, %v245
    %251 = vrot.lane.b32.xlu0 %v148, 96
    %v252 = vpop.permute.xlu0 %251
    %253 = vrot.lane.b32.xlu0 %v150, 96
    %v254 = vpop.permute.xlu0 %253
    %v257 = vadd.f32 %v247, %v252
    %v258 = vadd.f32 %v248, %v254
    %v259 = vmax.f32 %v257, 0.0
    %v260 = vmax.f32 %v258, 0.0
    %v261 = vpack.c.bf16 %v260, %v259
    %s262 = scalar_lea.vmem %s2, 32
    %v263 = vld [vmem:[%s262] sm:$0xf]
    %v264 = vld [vmem:[%s262 + $0x4] sm:$0xf]
    %v265 = vld [vmem:[%s262 + $0x8] sm:$0xf]
    %v266 = vld [vmem:[%s262 + $0xc] sm:$0xf]
    %v267 = vperm.slane %v167, 0
    %v272 = vunpack.c.l.b16 %v263
    %v273 = vunpack.c.l.b16 %v264
    %v274 = vunpack.c.l.b16 %v265
    %v275 = vunpack.c.l.b16 %v266
    %v276 = vpack.c.b16 %v273, %v272
    %v277 = vpack.c.b16 %v275, %v274
    %v281 = vsel %vm191, %v261, 0
    %283 = vmatpush.bf16.msra.mxu0 0
    %284 = vmatpush.bf16.msra.mxu0 0
    %285 = vmatpush.bf16.msra.mxu0 0
    %286 = vmatpush.bf16.msra.mxu0 0
    %287 = vmatpush.bf16.msra.mxu0 0
    %288 = vmatpush.bf16.msra.mxu0 0
    %289 = vmatpush.bf16.msra.mxu0 %v277
    %290 = vmatpush.bf16.msra.mxu0 %v276
    %291 = vmatmul.bf16.gmra.mxu0 %v281
    %v292 = vpop.f32.mrf.mxu0
    %v293 = vadd.f32 %v267, %v292
    %v294 = vpop.f32.mrf.mxu0
    %v295 = vadd.f32 %v267, %v294
    %296 = vdwg.mxu0
    %v297 = vmax.f32 %v293, 0.0
    %v298 = vmax.f32 %v295, 0.0
    %v299 = vpack.c.bf16 %v298, %v297
    %s300 = scalar_lea.vmem %s2, 48
    %v301 = vld [vmem:[%s300] sm:$0xf]
    %v302 = vld [vmem:[%s300 + $0x4] sm:$0xf]
    %v303 = vld [vmem:[%s300 + $0x8] sm:$0xf]
    %v304 = vld [vmem:[%s300 + $0xc] sm:$0xf]
    %v305 = vperm.slane %v167, 1
    %v310 = vunpack.c.l.b16 %v301
    %v311 = vunpack.c.l.b16 %v302
    %v312 = vunpack.c.l.b16 %v303
    %v313 = vunpack.c.l.b16 %v304
    %v314 = vpack.c.b16 %v311, %v310
    %v315 = vpack.c.b16 %v313, %v312
    %v319 = vsel %vm191, %v299, 0
    %321 = vmatpush.bf16.msra.mxu0 0
    %322 = vmatpush.bf16.msra.mxu0 0
    %323 = vmatpush.bf16.msra.mxu0 0
    %324 = vmatpush.bf16.msra.mxu0 0
    %325 = vmatpush.bf16.msra.mxu0 0
    %326 = vmatpush.bf16.msra.mxu0 0
    %327 = vmatpush.bf16.msra.mxu0 %v315
    %328 = vmatpush.bf16.msra.mxu0 %v314
    %329 = vmatmul.bf16.gmra.mxu0 %v319
    %v330 = vpop.f32.mrf.mxu0
    %v331 = vadd.f32 %v305, %v330
    %v332 = vpop.f32.mrf.mxu0
    %v333 = vadd.f32 %v305, %v332
    %334 = vdwg.mxu0
    %v335 = vadd.f32 %v257, %v331
    %v336 = vadd.f32 %v258, %v333
    %337 = vrot.lane.b32.xlu0 %v148, 64
    %v338 = vpop.permute.xlu0 %337
    %339 = vrot.lane.b32.xlu0 %v150, 64
    %v340 = vpop.permute.xlu0 %339
    %v343 = vadd.f32 %v335, %v338
    %v344 = vadd.f32 %v336, %v340
    %v345 = vmax.f32 %v343, 0.0
    %v346 = vmax.f32 %v344, 0.0
    %v347 = vpack.c.bf16 %v346, %v345
    %s348 = scalar_lea.vmem %s2, 64
    %v349 = vld [vmem:[%s348] sm:$0xf]
    %v350 = vld [vmem:[%s348 + $0x4] sm:$0xf]
    %v351 = vld [vmem:[%s348 + $0x8] sm:$0xf]
    %v352 = vld [vmem:[%s348 + $0xc] sm:$0xf]
    %v353 = vperm.slane %v168, 0
    %v358 = vunpack.c.l.b16 %v349
    %v359 = vunpack.c.l.b16 %v350
    %v360 = vunpack.c.l.b16 %v351
    %v361 = vunpack.c.l.b16 %v352
    %v362 = vpack.c.b16 %v359, %v358
    %v363 = vpack.c.b16 %v361, %v360
    %v367 = vsel %vm191, %v347, 0
    %369 = vmatpush.bf16.msra.mxu0 0
    %370 = vmatpush.bf16.msra.mxu0 0
    %371 = vmatpush.bf16.msra.mxu0 0
    %372 = vmatpush.bf16.msra.mxu0 0
    %373 = vmatpush.bf16.msra.mxu0 0
    %374 = vmatpush.bf16.msra.mxu0 0
    %375 = vmatpush.bf16.msra.mxu0 %v363
    %376 = vmatpush.bf16.msra.mxu0 %v362
    %377 = vmatmul.bf16.gmra.mxu0 %v367
    %v378 = vpop.f32.mrf.mxu0
    %v379 = vadd.f32 %v353, %v378
    %v380 = vpop.f32.mrf.mxu0
    %v381 = vadd.f32 %v353, %v380
    %382 = vdwg.mxu0
    %v383 = vmax.f32 %v379, 0.0
    %v384 = vmax.f32 %v381, 0.0
    %v385 = vpack.c.bf16 %v384, %v383
    %s386 = scalar_lea.vmem %s2, 80
    %v387 = vld [vmem:[%s386] sm:$0xf]
    %v388 = vld [vmem:[%s386 + $0x4] sm:$0xf]
    %v389 = vld [vmem:[%s386 + $0x8] sm:$0xf]
    %v390 = vld [vmem:[%s386 + $0xc] sm:$0xf]
    %v391 = vperm.slane %v168, 1
    %v396 = vunpack.c.l.b16 %v387
    %v397 = vunpack.c.l.b16 %v388
    %v398 = vunpack.c.l.b16 %v389
    %v399 = vunpack.c.l.b16 %v390
    %v400 = vpack.c.b16 %v397, %v396
    %v401 = vpack.c.b16 %v399, %v398
    %v405 = vsel %vm191, %v385, 0
    %407 = vmatpush.bf16.msra.mxu0 0
    %408 = vmatpush.bf16.msra.mxu0 0
    %409 = vmatpush.bf16.msra.mxu0 0
    %410 = vmatpush.bf16.msra.mxu0 0
    %411 = vmatpush.bf16.msra.mxu0 0
    %412 = vmatpush.bf16.msra.mxu0 0
    %413 = vmatpush.bf16.msra.mxu0 %v401
    %414 = vmatpush.bf16.msra.mxu0 %v400
    %415 = vmatmul.bf16.gmra.mxu0 %v405
    %v416 = vpop.f32.mrf.mxu0
    %v417 = vadd.f32 %v391, %v416
    %v418 = vpop.f32.mrf.mxu0
    %v419 = vadd.f32 %v391, %v418
    %420 = vdwg.mxu0
    %v421 = vadd.f32 %v343, %v417
    %v422 = vadd.f32 %v344, %v419
    %423 = vrot.lane.b32.xlu0 %v148, 32
    %v424 = vpop.permute.xlu0 %423
    %425 = vrot.lane.b32.xlu0 %v150, 32
    %v426 = vpop.permute.xlu0 %425
    %v429 = vadd.f32 %v421, %v424
    %v430 = vadd.f32 %v422, %v426
    %v431 = vmax.f32 %v429, 0.0
    %v432 = vmax.f32 %v430, 0.0
    %v433 = vpack.c.bf16 %v432, %v431
    %s434 = scalar_lea.vmem %s2, 96
    %v435 = vld [vmem:[%s434] sm:$0xf]
    %v436 = vld [vmem:[%s434 + $0x4] sm:$0xf]
    %v437 = vld [vmem:[%s434 + $0x8] sm:$0xf]
    %v438 = vld [vmem:[%s434 + $0xc] sm:$0xf]
    %v439 = vperm.slane %v169, 0
    %v444 = vunpack.c.l.b16 %v435
    %v445 = vunpack.c.l.b16 %v436
    %v446 = vunpack.c.l.b16 %v437
    %v447 = vunpack.c.l.b16 %v438
    %v448 = vpack.c.b16 %v445, %v444
    %v449 = vpack.c.b16 %v447, %v446
    %v453 = vsel %vm191, %v433, 0
    %455 = vmatpush.bf16.msra.mxu0 0
    %456 = vmatpush.bf16.msra.mxu0 0
    %457 = vmatpush.bf16.msra.mxu0 0
    %458 = vmatpush.bf16.msra.mxu0 0
    %459 = vmatpush.bf16.msra.mxu0 0
    %460 = vmatpush.bf16.msra.mxu0 0
    %461 = vmatpush.bf16.msra.mxu0 %v449
    %462 = vmatpush.bf16.msra.mxu0 %v448
    %463 = vmatmul.bf16.gmra.mxu0 %v453
    %v464 = vpop.f32.mrf.mxu0
    %v465 = vadd.f32 %v439, %v464
    %v466 = vpop.f32.mrf.mxu0
    %v467 = vadd.f32 %v439, %v466
    %468 = vdwg.mxu0
    %v469 = vmax.f32 %v465, 0.0
    %v470 = vmax.f32 %v467, 0.0
    %v471 = vpack.c.bf16 %v470, %v469
    %s472 = scalar_lea.vmem %s2, 112
    %v473 = vld [vmem:[%s472] sm:$0xf]
    %v474 = vld [vmem:[%s472 + $0x4] sm:$0xf]
    %v475 = vld [vmem:[%s472 + $0x8] sm:$0xf]
    %v476 = vld [vmem:[%s472 + $0xc] sm:$0xf]
    %v477 = vperm.slane %v169, 1
    %v482 = vunpack.c.l.b16 %v473
    %v483 = vunpack.c.l.b16 %v474
    %v484 = vunpack.c.l.b16 %v475
    %v485 = vunpack.c.l.b16 %v476
    %v486 = vpack.c.b16 %v483, %v482
    %v487 = vpack.c.b16 %v485, %v484
    %v491 = vsel %vm191, %v471, 0
    %493 = vmatpush.bf16.msra.mxu0 0
    %494 = vmatpush.bf16.msra.mxu0 0
    %495 = vmatpush.bf16.msra.mxu0 0
    %496 = vmatpush.bf16.msra.mxu0 0
    %497 = vmatpush.bf16.msra.mxu0 0
    %498 = vmatpush.bf16.msra.mxu0 0
    %499 = vmatpush.bf16.msra.mxu0 %v487
    %500 = vmatpush.bf16.msra.mxu0 %v486
    %501 = vmatmul.bf16.gmra.mxu0 %v491
    %v502 = vpop.f32.mrf.mxu0
    %v503 = vadd.f32 %v477, %v502
    %v504 = vpop.f32.mrf.mxu0
    %v505 = vadd.f32 %v477, %v504
    %506 = vdwg.mxu0
    %v507 = vadd.f32 %v429, %v503
    %v508 = vadd.f32 %v430, %v505
    %v509 = vadd.f32 %v507, %v162
    %v510 = vadd.f32 %v508, %v164
    %v511 = vmax.f32 %v509, 0.0
    %v512 = vmax.f32 %v510, 0.0
    %v513 = vpack.c.bf16 %v512, %v511
    %s514 = scalar_lea.vmem %s2, 128
    %v515 = vld [vmem:[%s514] sm:$0xf]
    %v516 = vld [vmem:[%s514 + $0x4] sm:$0xf]
    %v517 = vld [vmem:[%s514 + $0x8] sm:$0xf]
    %v518 = vld [vmem:[%s514 + $0xc] sm:$0xf]
    %v519 = vperm.slane %v170, 0
    %v524 = vunpack.c.l.b16 %v515
    %v525 = vunpack.c.l.b16 %v516
    %v526 = vunpack.c.l.b16 %v517
    %v527 = vunpack.c.l.b16 %v518
    %v528 = vpack.c.b16 %v525, %v524
    %v529 = vpack.c.b16 %v527, %v526
    %v533 = vsel %vm191, %v513, 0
    %535 = vmatpush.bf16.msra.mxu0 0
    %536 = vmatpush.bf16.msra.mxu0 0
    %537 = vmatpush.bf16.msra.mxu0 0
    %538 = vmatpush.bf16.msra.mxu0 0
    %539 = vmatpush.bf16.msra.mxu0 0
    %540 = vmatpush.bf16.msra.mxu0 0
    %541 = vmatpush.bf16.msra.mxu0 %v529
    %542 = vmatpush.bf16.msra.mxu0 %v528
    %543 = vmatmul.bf16.gmra.mxu0 %v533
    %v544 = vpop.f32.mrf.mxu0
    %v545 = vadd.f32 %v519, %v544
    %v546 = vpop.f32.mrf.mxu0
    %v547 = vadd.f32 %v519, %v546
    %548 = vdwg.mxu0
    %v549 = vmax.f32 %v545, 0.0
    %v550 = vmax.f32 %v547, 0.0
    %v551 = vpack.c.bf16 %v550, %v549
    %s552 = scalar_lea.vmem %s2, 144
    %v553 = vld [vmem:[%s552] sm:$0xf]
    %v554 = vld [vmem:[%s552 + $0x4] sm:$0xf]
    %v555 = vld [vmem:[%s552 + $0x8] sm:$0xf]
    %v556 = vld [vmem:[%s552 + $0xc] sm:$0xf]
    %v557 = vperm.slane %v170, 1
    %v562 = vunpack.c.l.b16 %v553
    %v563 = vunpack.c.l.b16 %v554
    %v564 = vunpack.c.l.b16 %v555
    %v565 = vunpack.c.l.b16 %v556
    %v566 = vpack.c.b16 %v563, %v562
    %v567 = vpack.c.b16 %v565, %v564
    %v571 = vsel %vm191, %v551, 0
    %573 = vmatpush.bf16.msra.mxu0 0
    %574 = vmatpush.bf16.msra.mxu0 0
    %575 = vmatpush.bf16.msra.mxu0 0
    %576 = vmatpush.bf16.msra.mxu0 0
    %577 = vmatpush.bf16.msra.mxu0 0
    %578 = vmatpush.bf16.msra.mxu0 0
    %579 = vmatpush.bf16.msra.mxu0 %v567
    %580 = vmatpush.bf16.msra.mxu0 %v566
    %581 = vmatmul.bf16.gmra.mxu0 %v571
    %v582 = vpop.f32.mrf.mxu0
    %v583 = vadd.f32 %v557, %v582
    %v584 = vpop.f32.mrf.mxu0
    %v585 = vadd.f32 %v557, %v584
    %586 = vdwg.mxu0
    %v587 = vadd.f32 %v509, %v583
    %v588 = vadd.f32 %v510, %v585
    %v589 = vmax.f32 %v587, 0.0
    %v590 = vmax.f32 %v588, 0.0
    %v591 = vpack.c.bf16 %v590, %v589
    %v592 = vld [vmem:[#allocation5] sm:$0xf]
    %v593 = vld [vmem:[#allocation5 + $0x4] sm:$0xf]
    %v594 = vld [vmem:[#allocation5 + $0x8] sm:$0xf]
    %v595 = vld [vmem:[#allocation5 + $0xc] sm:$0xf]
    %v600 = vunpack.c.l.b16 %v592
    %v601 = vunpack.c.l.b16 %v593
    %v602 = vunpack.c.l.b16 %v594
    %v603 = vunpack.c.l.b16 %v595
    %v604 = vpack.c.b16 %v601, %v600
    %v605 = vpack.c.b16 %v603, %v602
    %v609 = vsel %vm191, %v591, 0
    %611 = vmatpush.bf16.msra.mxu0 0
    %612 = vmatpush.bf16.msra.mxu0 0
    %613 = vmatpush.bf16.msra.mxu0 0
    %614 = vmatpush.bf16.msra.mxu0 0
    %615 = vmatpush.bf16.msra.mxu0 0
    %616 = vmatpush.bf16.msra.mxu0 0
    %617 = vmatpush.bf16.msra.mxu0 %v605
    %618 = vmatpush.bf16.msra.mxu0 %v604
    %619 = vmatmul.bf16.gmra.mxu0 %v609
    %v620 = vpop.f32.mrf.mxu0
    %v621 = vadd.f32 0.0, %v620
    %v622 = vpop.f32.mrf.mxu0
    %v623 = vadd.f32 0.0, %v622
    %624 = vdwg.mxu0
    %625 = vst [vmem:[#allocation7] sm:$0xff] %v621
    %626 = vst [vmem:[#allocation7 + $0x8] sm:$0xff] %v623
    // Predicated region
    $region30: #{tpu_custom_call.1} parent=1 // pred_check
      _
    $region31: #{tpu_custom_call.1} parent=1 // pred_check_branch
      %628 = sbr.rel (0) target = $region33
    $region32: #{tpu_custom_call.1} parent=1 // pred_region
      %630 = vsyncadd [#allocation4], 0
      %s631 = sshll.u32 [#allocation7], 4
      %s632 = int_to_ptr.vmem [resolvable:$true] %s631
      %s633 = sshll.u32 %s5, 4
      %s634 = int_to_ptr.hbm [resolvable:$true] %s633
      %639 = dma.vmem_to_hbm [thread:$0]  %s632, 256, %s634, [#allocation4], 128, 128, 8
    $region33: #{tpu_custom_call.1} parent=1 // pred_fallthru
      _
    // Predicated region
    $region34: #{tpu_custom_call.1} parent=1 // pred_check
      _
    $region35: #{tpu_custom_call.1} parent=1 // pred_check_branch
      %641 = sbr.rel (0) target = $region37
    $region36: #{tpu_custom_call.1} parent=1 // pred_region
      %643 = dma.done [#allocation4], 256
    $region37: #{tpu_custom_call.1} parent=1 // pred_fallthru
      _
    %644 = vsyncpa [#allocation3], 1
    %645 = vsyncpa [#allocation6], 1
    %646 = vsyncpa [#allocation4], 1

</llo_original>
